<compile_context>
chip_gen: v5e
topology: v5e:2x2
jax: 0.10.0
libtpu: 0.0.40
codegen_flags: <defaults>
</compile_context>

<pallas_src>
import functools

import jax
import jax.numpy as jnp
from jax.experimental import pallas as pl
from jax.experimental.pallas import tpu as pltpu

HIDDEN = 128
N_ACT1 = 3
N_ACT2 = 5
N_OUT = N_ACT1 + N_ACT2   # 8 fused action-value columns
BATCH_TILE = 2048         # batch tile for the gridded (large-B) path
_SUBLANE = 16             # bf16 sublane packing


def _round_up(x, m):
    return (x + m - 1) // m * m


def dqn_kernel(x_ref, w1_ref, b1_ref, w2_ref, b2_ref, wh_ref, bh_ref, out_ref):
    # Whole MLP hot path (3 matmuls + bias + relu + fused head concat) on one
    # (TB, *) batch tile.  Weight/bias blocks use constant index_maps so they
    # stay resident in VMEM across the batch grid (revisited, not re-DMA'd).
    x = x_ref[...].astype(jnp.bfloat16)                             # (TB, n_obs)
    h1 = jnp.dot(x, w1_ref[...], preferred_element_type=jnp.float32)
    h1 = jnp.maximum(h1 + b1_ref[...], 0.0).astype(jnp.bfloat16)    # relu(layer1)
    h2 = jnp.dot(h1, w2_ref[...], preferred_element_type=jnp.float32)
    h2 = jnp.maximum(h2 + b2_ref[...], 0.0).astype(jnp.bfloat16)    # relu(layer2)
    # fused action heads: columns [0:3) = layer_action_1, [3:8) = layer_action_2
    out = jnp.dot(h2, wh_ref[...], preferred_element_type=jnp.float32)
    out_ref[...] = (out + bh_ref[...]).astype(out_ref.dtype)        # (TB, 8) f32


def prepare_params(params, compute_dtype=jnp.bfloat16):
    """One-time fusion/packing of the (PyTorch-layout, transposed) parameters.

    Column-stacks the two action heads (mathematically identical to
    torch.cat([head1(x), head2(x)], dim=1)).  Weights go to bf16 (MXU-native,
    halves weight DMA bytes); biases stay f32 since they are added to the f32
    accumulator.
    """
    w1, b1, w2, b2, wa1, ba1, wa2, ba2 = params
    wh = jnp.concatenate([wa1, wa2], axis=1)                        # (128, 8)
    bh = jnp.concatenate([ba1, ba2], axis=1)                        # (1, 8)
    return (
        w1.astype(compute_dtype), b1.astype(jnp.float32),
        w2.astype(compute_dtype), b2.astype(jnp.float32),
        wh.astype(compute_dtype), bh.astype(jnp.float32),
    )


@functools.partial(jax.jit, static_argnames=("block_b",))
def dqn_forward(x, fused_params, *, block_b=BATCH_TILE):
    w1, b1, w2, b2, wh, bh = fused_params
    B, n_obs = x.shape

    # Batch tile selection:
    #   B <= 16           -> single ragged tile (grid=(1,)).
    #   16 < B <= block_b -> exactly 2 tiles so v7x can use both TensorCores.
    #   B  > block_b      -> fat BATCH_TILE tiles, ragged tail handled by Pallas.
    if B <= _SUBLANE:
        tb = _SUBLANE
    elif B <= block_b:
        tb = _round_up(pl.cdiv(B, 2), _SUBLANE)
    else:
        tb = block_b
    grid = (pl.cdiv(B, tb),)

    flops = 2 * B * (n_obs * HIDDEN + HIDDEN * HIDDEN + HIDDEN * N_OUT)
    bytes_accessed = (
        x.size * x.dtype.itemsize
        + sum(a.size * a.dtype.itemsize for a in (w1, b1, w2, b2, wh, bh))
        + B * N_OUT * 4
    )

    out = pl.pallas_call(
        dqn_kernel,
        out_shape=jax.ShapeDtypeStruct((B, N_OUT), jnp.float32),
        grid=grid,
        in_specs=[
            pl.BlockSpec((tb, n_obs), lambda i: (i, 0)),        # x tile
            pl.BlockSpec((n_obs, HIDDEN), lambda i: (0, 0)),    # w1 (resident)
            pl.BlockSpec((1, HIDDEN), lambda i: (0, 0)),        # b1
            pl.BlockSpec((HIDDEN, HIDDEN), lambda i: (0, 0)),   # w2
            pl.BlockSpec((1, HIDDEN), lambda i: (0, 0)),        # b2
            pl.BlockSpec((HIDDEN, N_OUT), lambda i: (0, 0)),    # fused heads W
            pl.BlockSpec((1, N_OUT), lambda i: (0, 0)),         # fused heads b
        ],
        out_specs=pl.BlockSpec((tb, N_OUT), lambda i: (i, 0)),
        compiler_params=pltpu.CompilerParams(
            dimension_semantics=("parallel",)),
        cost_estimate=pl.CostEstimate(
            flops=flops, transcendentals=0, bytes_accessed=bytes_accessed),
    )(x, w1, b1, w2, b2, wh, bh)

    return out                                                   # (B, 8)


def init_params(key, n_observations):
    """Deterministic init mirroring nn.Linear default U(-1/sqrt(in), 1/sqrt(in)).

    Weights are stored as (in_features, out_features)."""
    def linear(key, fan_in, fan_out):
        kw, kb = jax.random.split(key)
        bound = 1.0 / jnp.sqrt(jnp.float32(fan_in))
        w = jax.random.uniform(kw, (fan_in, fan_out), jnp.float32, -bound, bound)
        b = jax.random.uniform(kb, (1, fan_out), jnp.float32, -bound, bound)
        return w, b

    k1, k2, k3, k4 = jax.random.split(key, 4)
    w1, b1 = linear(k1, n_observations, HIDDEN)   # layer1
    w2, b2 = linear(k2, HIDDEN, HIDDEN)           # layer2
    wa1, ba1 = linear(k3, HIDDEN, N_ACT1)         # layer_action_1
    wa2, ba2 = linear(k4, HIDDEN, N_ACT2)         # layer_action_2
    return (w1, b1, w2, b2, wa1, ba1, wa2, ba2)


def _reference_bf16(x, raw_params):
    """Same bf16-weight / f32-accum computation in plain JAX."""
    w1, b1, w2, b2, wa1, ba1, wa2, ba2 = raw_params
    xb = x.astype(jnp.bfloat16)
    h1 = jnp.maximum(jnp.dot(xb, w1.astype(jnp.bfloat16),
                             preferred_element_type=jnp.float32) + b1, 0.0)
    h1 = h1.astype(jnp.bfloat16)
    h2 = jnp.maximum(jnp.dot(h1, w2.astype(jnp.bfloat16),
                             preferred_element_type=jnp.float32) + b2, 0.0)
    h2 = h2.astype(jnp.bfloat16)
    return jnp.concatenate(
        [jnp.dot(h2, wa1.astype(jnp.bfloat16),
                 preferred_element_type=jnp.float32) + ba1,
         jnp.dot(h2, wa2.astype(jnp.bfloat16),
                 preferred_element_type=jnp.float32) + ba2], axis=1)


def _reference_f32(x, raw_params):
    """Full-f32 PyTorch-equivalent forward."""
    w1, b1, w2, b2, wa1, ba1, wa2, ba2 = raw_params
    h1 = jnp.maximum(x @ w1 + b1, 0.0)
    h2 = jnp.maximum(h1 @ w2 + b2, 0.0)
    return jnp.concatenate([h2 @ wa1 + ba1, h2 @ wa2 + ba2], axis=1)


if __name__ == "__main__":
    batch = 2
    n_observations = 16

    key = jax.random.PRNGKey(0)
    k_params, k_x = jax.random.split(key)

    raw_params = init_params(k_params, n_observations)
    fused = prepare_params(raw_params)          # done ONCE, not per forward
    x = jax.random.normal(k_x, (batch, n_observations), jnp.float32)

    out = jax.block_until_ready(dqn_forward(x, fused))
    assert out.shape == (batch, N_OUT), out.shape
    assert jnp.allclose(out, _reference_bf16(x, raw_params), atol=1e-3, rtol=1e-3)
    assert jnp.allclose(out, _reference_f32(x, raw_params), atol=5e-2, rtol=5e-2)

    # Mid-size batch: exercises the 2-block (v7x dual-TensorCore) path with a
    # ragged last tile.
    x_mid = jax.random.normal(jax.random.PRNGKey(1), (1000, n_observations),
                              jnp.float32)
    out_mid = jax.block_until_ready(dqn_forward(x_mid, fused))
    assert out_mid.shape == (1000, N_OUT), out_mid.shape
    assert jnp.allclose(out_mid, _reference_bf16(x_mid, raw_params),
                        atol=1e-3, rtol=1e-3)

    # Large batch: exercises the BATCH_TILE-gridded path (ragged tail tile).
    x_big = jax.random.normal(jax.random.PRNGKey(2), (3000, n_observations),
                              jnp.float32)
    out_big = jax.block_until_ready(dqn_forward(x_big, fused))
    assert out_big.shape == (3000, N_OUT), out_big.shape
    assert jnp.allclose(out_big, _reference_bf16(x_big, raw_params),
                        atol=1e-3, rtol=1e-3)

    print("KERNEL_OK")
</pallas_src>

<mosaic_0001>
module attributes {stable_mosaic.version = 11 : i64} {
  func.func @dqn_kernel(%arg0: i32, %arg1: memref<16x16xf32, #tpu.memory_space<vmem>>, %arg2: memref<16x128xbf16, #tpu.memory_space<vmem>>, %arg3: memref<1x128xf32, #tpu.memory_space<vmem>>, %arg4: memref<128x128xbf16, #tpu.memory_space<vmem>>, %arg5: memref<1x128xf32, #tpu.memory_space<vmem>>, %arg6: memref<128x8xbf16, #tpu.memory_space<vmem>>, %arg7: memref<1x8xf32, #tpu.memory_space<vmem>>, %arg8: memref<16x8xf32, #tpu.memory_space<vmem>>) attributes {dimension_semantics = [#tpu.dimension_semantics<parallel>], iteration_bounds = array<i64: 1>, scalar_prefetch = 0 : i64, scratch_operands = 0 : i64, tpu.core_type = #tpu.core_type<tc>, window_params = [{transform_indices = @transform_0, window_bounds = array<i64: 16, 16>}, {pipeline_mode = #tpu.pipeline_mode<synchronous>, transform_indices = @transform_1, window_bounds = array<i64: 16, 128>}, {pipeline_mode = #tpu.pipeline_mode<synchronous>, transform_indices = @transform_2, window_bounds = array<i64: 1, 128>}, {pipeline_mode = #tpu.pipeline_mode<synchronous>, transform_indices = @transform_3, window_bounds = array<i64: 128, 128>}, {pipeline_mode = #tpu.pipeline_mode<synchronous>, transform_indices = @transform_4, window_bounds = array<i64: 1, 128>}, {pipeline_mode = #tpu.pipeline_mode<synchronous>, transform_indices = @transform_5, window_bounds = array<i64: 128, 8>}, {pipeline_mode = #tpu.pipeline_mode<synchronous>, transform_indices = @transform_6, window_bounds = array<i64: 1, 8>}, {transform_indices = @transform_7, window_bounds = array<i64: 16, 8>}]} {
    %c0 = arith.constant 0 : index
    %c0_0 = arith.constant 0 : index
    %0 = vector.load %arg1[%c0, %c0_0] : memref<16x16xf32, #tpu.memory_space<vmem>>, vector<16x16xf32>
    %1 = arith.truncf %0 : vector<16x16xf32> to vector<16x16xbf16>
    %c0_1 = arith.constant 0 : index
    %c0_2 = arith.constant 0 : index
    %2 = vector.load %arg2[%c0_1, %c0_2] : memref<16x128xbf16, #tpu.memory_space<vmem>>, vector<16x128xbf16>
    %cst = arith.constant dense<0.000000e+00> : vector<16x128xf32>
    %3 = tpu.matmul %1, %2, %cst {dimension_numbers = #tpu.dot_dimension_numbers<[1], [0], [0], [1], [0, 0, 1, 1], [], []>} : vector<16x16xbf16>, vector<16x128xbf16>, vector<16x128xf32> -> vector<16x128xf32>
    %c0_3 = arith.constant 0 : index
    %c0_4 = arith.constant 0 : index
    %4 = vector.load %arg3[%c0_3, %c0_4] : memref<1x128xf32, #tpu.memory_space<vmem>>, vector<1x128xf32>
    %5 = vector.broadcast %4 : vector<1x128xf32> to vector<16x128xf32>
    %6 = arith.addf %3, %5 : vector<16x128xf32>
    %cst_5 = arith.constant 0.000000e+00 : f32
    %7 = vector.broadcast %cst_5 : f32 to vector<16x128xf32>
    %8 = arith.maximumf %6, %7 : vector<16x128xf32>
    %9 = arith.truncf %8 : vector<16x128xf32> to vector<16x128xbf16>
    %c0_6 = arith.constant 0 : index
    %c0_7 = arith.constant 0 : index
    %10 = vector.load %arg4[%c0_6, %c0_7] : memref<128x128xbf16, #tpu.memory_space<vmem>>, vector<128x128xbf16>
    %cst_8 = arith.constant dense<0.000000e+00> : vector<16x128xf32>
    %11 = tpu.matmul %9, %10, %cst_8 {dimension_numbers = #tpu.dot_dimension_numbers<[1], [0], [0], [1], [0, 0, 1, 1], [], []>} : vector<16x128xbf16>, vector<128x128xbf16>, vector<16x128xf32> -> vector<16x128xf32>
    %c0_9 = arith.constant 0 : index
    %c0_10 = arith.constant 0 : index
    %12 = vector.load %arg5[%c0_9, %c0_10] : memref<1x128xf32, #tpu.memory_space<vmem>>, vector<1x128xf32>
    %13 = vector.broadcast %12 : vector<1x128xf32> to vector<16x128xf32>
    %14 = arith.addf %11, %13 : vector<16x128xf32>
    %cst_11 = arith.constant 0.000000e+00 : f32
    %15 = vector.broadcast %cst_11 : f32 to vector<16x128xf32>
    %16 = arith.maximumf %14, %15 : vector<16x128xf32>
    %17 = arith.truncf %16 : vector<16x128xf32> to vector<16x128xbf16>
    %c0_12 = arith.constant 0 : index
    %c0_13 = arith.constant 0 : index
    %18 = vector.load %arg6[%c0_12, %c0_13] : memref<128x8xbf16, #tpu.memory_space<vmem>>, vector<128x8xbf16>
    %cst_14 = arith.constant dense<0.000000e+00> : vector<16x8xf32>
    %19 = tpu.matmul %17, %18, %cst_14 {dimension_numbers = #tpu.dot_dimension_numbers<[1], [0], [0], [1], [0, 0, 1, 1], [], []>} : vector<16x128xbf16>, vector<128x8xbf16>, vector<16x8xf32> -> vector<16x8xf32>
    %c0_15 = arith.constant 0 : index
    %c0_16 = arith.constant 0 : index
    %20 = vector.load %arg7[%c0_15, %c0_16] : memref<1x8xf32, #tpu.memory_space<vmem>>, vector<1x8xf32>
    %21 = vector.broadcast %20 : vector<1x8xf32> to vector<16x8xf32>
    %22 = arith.addf %19, %21 : vector<16x8xf32>
    %c0_17 = arith.constant 0 : index
    %c0_18 = arith.constant 0 : index
    %23 = vector.load %arg8[%c0_17, %c0_18] : memref<16x8xf32, #tpu.memory_space<vmem>>, vector<16x8xf32>
    tpu.vector_store %arg8[%c0_17, %c0_18], %22 {strides = array<i32>} : memref<16x8xf32, #tpu.memory_space<vmem>>, vector<16x8xf32>,
    return
  }
  func.func @transform_0(%arg0: i32) -> (i32, i32) {
    %c0_i32 = arith.constant 0 : i32
    %c0_i32_0 = arith.constant 0 : i32
    return %arg0, %c0_i32 : i32, i32
  }
  func.func @transform_1(%arg0: i32) -> (i32, i32) {
    %c0_i32 = arith.constant 0 : i32
    %c0_i32_0 = arith.constant 0 : i32
    %c0_i32_1 = arith.constant 0 : i32
    return %c0_i32, %c0_i32_0 : i32, i32
  }
  func.func @transform_2(%arg0: i32) -> (i32, i32) {
    %c0_i32 = arith.constant 0 : i32
    %c0_i32_0 = arith.constant 0 : i32
    %c0_i32_1 = arith.constant 0 : i32
    return %c0_i32, %c0_i32_0 : i32, i32
  }
  func.func @transform_3(%arg0: i32) -> (i32, i32) {
    %c0_i32 = arith.constant 0 : i32
    %c0_i32_0 = arith.constant 0 : i32
    %c0_i32_1 = arith.constant 0 : i32
    return %c0_i32, %c0_i32_0 : i32, i32
  }
  func.func @transform_4(%arg0: i32) -> (i32, i32) {
    %c0_i32 = arith.constant 0 : i32
    %c0_i32_0 = arith.constant 0 : i32
    %c0_i32_1 = arith.constant 0 : i32
    return %c0_i32, %c0_i32_0 : i32, i32
  }
  func.func @transform_5(%arg0: i32) -> (i32, i32) {
    %c0_i32 = arith.constant 0 : i32
    %c0_i32_0 = arith.constant 0 : i32
    %c0_i32_1 = arith.constant 0 : i32
    return %c0_i32, %c0_i32_0 : i32, i32
  }
  func.func @transform_6(%arg0: i32) -> (i32, i32) {
    %c0_i32 = arith.constant 0 : i32
    %c0_i32_0 = arith.constant 0 : i32
    %c0_i32_1 = arith.constant 0 : i32
    return %c0_i32, %c0_i32_0 : i32, i32
  }
  func.func @transform_7(%arg0: i32) -> (i32, i32) {
    %c0_i32 = arith.constant 0 : i32
    %c0_i32_0 = arith.constant 0 : i32
    return %arg0, %c0_i32 : i32, i32
  }
}

</mosaic_0001>

<llo_original>
// kernel: dqn_forward.1
$region0: #{dqn_forward.1}
  #allocation0 [shape = 'u32[]', space=smem, size = 0x4, offset = 0x4, fixed_abs, tag = 'smem constant byte address 0x4 - core index']
  #allocation1 [shape = 'u32[72,128]{1,0:T(1,128)}', space=vmem, size = 0x9000, scoped, tag = 'internal scratch']
  %s0 = inlined_call_operand.vmem [shape: f32[2,16], index: 0, kind: input, shape index: {}]
  %s1 = inlined_call_operand.hbm [shape: bf16[16,128], index: 1, kind: input, shape index: {}]
  %s2 = inlined_call_operand.vmem [shape: f32[1,128], index: 2, kind: input, shape index: {}]
  %s3 = inlined_call_operand.vmem [shape: bf16[128,128], index: 3, kind: input, shape index: {}]
  %s4 = inlined_call_operand.vmem [shape: f32[1,128], index: 4, kind: input, shape index: {}]
  %s5 = inlined_call_operand.vmem [shape: bf16[128,8], index: 5, kind: input, shape index: {}]
  %s6 = inlined_call_operand.vmem [shape: f32[1,8], index: 6, kind: input, shape index: {}]
  %s7 = inlined_call_operand.hbm [shape: f32[2,8], index: 7, kind: output, shape index: {}]
  %s8 = sld [smem:[#allocation0]]
  $region42: #{dqn_forward.1} parent=0
    _
  %s10 = ssub.s32 1, %s8
  %s11 = scalar_select 0, %s10, %s8
  $region1: #{dqn_forward.1} parent=0
    #allocation2 [shape = 'u8[4096]{0}', space=vmem, size = 0x1000, scoped, tag = 'input window, operand 1, single buffered']
    #allocation3 [shape = 's32[1]{0}', space=sflag, size = 0x4, scoped, tag = 'scoped memory for dqn_forward.1']
    #allocation4 [shape = 's32[1]{0}', space=sflag, size = 0x4, scoped, tag = 'scoped memory for dqn_forward.1']
    #allocation5 [shape = 'u8[8192]{0}', space=vmem, size = 0x2000, scoped, tag = 'output window, operand 0, single buffered']
    %12 = vsyncpa [#allocation3], 0
    %13 = vsyncpa [#allocation4], 0
    // Predicated region
    $region2: #{dqn_forward.1} parent=1 // pred_check
      _
    $region3: #{dqn_forward.1} parent=1 // pred_check_branch
      %15 = sbr.rel (0) target = $region5
    $region4: #{dqn_forward.1} parent=1 // pred_region
      _
    $region5: #{dqn_forward.1} parent=1 // pred_fallthru
      _
    // Predicated region
    $region6: #{dqn_forward.1} parent=1 // pred_check
      _
    $region7: #{dqn_forward.1} parent=1 // pred_check_branch
      %17 = sbr.rel (0) target = $region9
    $region8: #{dqn_forward.1} parent=1 // pred_region
      %19 = vsyncadd [#allocation3], 0
      %s20 = sshll.u32 %s1, 4
      %s21 = int_to_ptr.hbm [resolvable:$true] %s20
      %s22 = sshll.u32 [#allocation2], 4
      %s23 = int_to_ptr.vmem [resolvable:$true] %s22
      %28 = dma.hbm_to_vmem [thread:$0]  %s21, 128, %s23, [#allocation3], 64, 64, 4
    $region9: #{dqn_forward.1} parent=1 // pred_fallthru
      _
    // Predicated region
    $region10: #{dqn_forward.1} parent=1 // pred_check
      _
    $region11: #{dqn_forward.1} parent=1 // pred_check_branch
      %30 = sbr.rel (0) target = $region13
    $region12: #{dqn_forward.1} parent=1 // pred_region
      _
    $region13: #{dqn_forward.1} parent=1 // pred_fallthru
      _
    // Predicated region
    $region14: #{dqn_forward.1} parent=1 // pred_check
      _
    $region15: #{dqn_forward.1} parent=1 // pred_check_branch
      %32 = sbr.rel (0) target = $region17
    $region16: #{dqn_forward.1} parent=1 // pred_region
      _
    $region17: #{dqn_forward.1} parent=1 // pred_fallthru
      _
    // Predicated region
    $region18: #{dqn_forward.1} parent=1 // pred_check
      _
    $region19: #{dqn_forward.1} parent=1 // pred_check_branch
      %34 = sbr.rel (0) target = $region21
    $region20: #{dqn_forward.1} parent=1 // pred_region
      _
    $region21: #{dqn_forward.1} parent=1 // pred_fallthru
      _
    // Predicated region
    $region22: #{dqn_forward.1} parent=1 // pred_check
      _
    $region23: #{dqn_forward.1} parent=1 // pred_check_branch
      %36 = sbr.rel (0) target = $region25
    $region24: #{dqn_forward.1} parent=1 // pred_region
      _
    $region25: #{dqn_forward.1} parent=1 // pred_fallthru
      _
    // Predicated region
    $region26: #{dqn_forward.1} parent=1 // pred_check
      _
    $region27: #{dqn_forward.1} parent=1 // pred_check_branch
      %38 = sbr.rel (0) target = $region29
    $region28: #{dqn_forward.1} parent=1 // pred_region
      _
    $region29: #{dqn_forward.1} parent=1 // pred_fallthru
      _
    // Predicated region
    $region30: #{dqn_forward.1} parent=1 // pred_check
      _
    $region31: #{dqn_forward.1} parent=1 // pred_check_branch
      %40 = sbr.rel (0) target = $region33
    $region32: #{dqn_forward.1} parent=1 // pred_region
      %42 = dma.done [#allocation3], 128
    $region33: #{dqn_forward.1} parent=1 // pred_fallthru
      _
    %v44 = vld [vmem:[%s0] sm:$0xff]
    %v45 = vld [vmem:[%s0 + $0x8] sm:$0xff]
    %v46 = vpack.c.bf16 %v45, %v44
    %v47 = vld [vmem:[#allocation2] sm:$0xf]
    %v48 = vld [vmem:[#allocation2 + $0x4] sm:$0xf]
    %v49 = vld [vmem:[%s2] sm:$0x1]
    %v51 = vperm.slane %v49, 0
    %v55 = vunpack.c.l.b16 %v47
    %v56 = vunpack.c.l.b16 %v48
    %v57 = vpack.c.b16 %v56, %v55
    %vm59 = vcmask 130048
    %v61 = vsel %vm59, %v46, 0
    %63 = vmatpush.bf16.msra.mxu0 0
    %64 = vmatpush.bf16.msra.mxu0 0
    %65 = vmatpush.bf16.msra.mxu0 0
    %66 = vmatpush.bf16.msra.mxu0 0
    %67 = vmatpush.bf16.msra.mxu0 0
    %68 = vmatpush.bf16.msra.mxu0 0
    %69 = vmatpush.bf16.msra.mxu0 0
    %70 = vmatpush.bf16.msra.mxu0 %v57
    %71 = vmatmul.bf16.gmra.mxu0 %v61
    %v72 = vpop.f32.mrf.mxu0
    %v73 = vadd.f32 %v51, %v72
    %v74 = vpop.f32.mrf.mxu0
    %v75 = vadd.f32 %v51, %v74
    %76 = vdwg.mxu0
    %v77 = vmax.f32 %v73, 0.0
    %v78 = vmax.f32 %v75, 0.0
    %v79 = vpack.c.bf16 %v78, %v77
    %v80 = vld [vmem:[%s3] sm:$0xf]
    %v81 = vld [vmem:[%s3 + $0x4] sm:$0xf]
    %v82 = vld [vmem:[%s3 + $0x8] sm:$0xf]
    %v83 = vld [vmem:[%s3 + $0xc] sm:$0xf]
    %v84 = vld [vmem:[%s3 + $0x10] sm:$0xf]
    %v85 = vld [vmem:[%s3 + $0x14] sm:$0xf]
    %v86 = vld [vmem:[%s3 + $0x18] sm:$0xf]
    %v87 = vld [vmem:[%s3 + $0x1c] sm:$0xf]
    %v88 = vld [vmem:[%s3 + $0x20] sm:$0xf]
    %v89 = vld [vmem:[%s3 + $0x24] sm:$0xf]
    %v90 = vld [vmem:[%s3 + $0x28] sm:$0xf]
    %v91 = vld [vmem:[%s3 + $0x2c] sm:$0xf]
    %v92 = vld [vmem:[%s3 + $0x30] sm:$0xf]
    %v93 = vld [vmem:[%s3 + $0x34] sm:$0xf]
    %v94 = vld [vmem:[%s3 + $0x38] sm:$0xf]
    %v95 = vld [vmem:[%s3 + $0x3c] sm:$0xf]
    %v96 = vld [vmem:[%s4] sm:$0x1]
    %v98 = vperm.slane %v96, 0
    %v116 = vunpack.c.l.b16 %v80
    %v117 = vunpack.c.l.b16 %v81
    %v118 = vunpack.c.l.b16 %v82
    %v119 = vunpack.c.l.b16 %v83
    %v120 = vunpack.c.l.b16 %v84
    %v121 = vunpack.c.l.b16 %v85
    %v122 = vunpack.c.l.b16 %v86
    %v123 = vunpack.c.l.b16 %v87
    %v124 = vunpack.c.l.b16 %v88
    %v125 = vunpack.c.l.b16 %v89
    %v126 = vunpack.c.l.b16 %v90
    %v127 = vunpack.c.l.b16 %v91
    %v128 = vunpack.c.l.b16 %v92
    %v129 = vunpack.c.l.b16 %v93
    %v130 = vunpack.c.l.b16 %v94
    %v131 = vunpack.c.l.b16 %v95
    %v132 = vpack.c.b16 %v117, %v116
    %v133 = vpack.c.b16 %v119, %v118
    %v134 = vpack.c.b16 %v121, %v120
    %v135 = vpack.c.b16 %v123, %v122
    %v136 = vpack.c.b16 %v125, %v124
    %v137 = vpack.c.b16 %v127, %v126
    %v138 = vpack.c.b16 %v129, %v128
    %v139 = vpack.c.b16 %v131, %v130
    %148 = vmatpush.bf16.msra.mxu0 %v139
    %149 = vmatpush.bf16.msra.mxu0 %v138
    %150 = vmatpush.bf16.msra.mxu0 %v137
    %151 = vmatpush.bf16.msra.mxu0 %v136
    %152 = vmatpush.bf16.msra.mxu0 %v135
    %153 = vmatpush.bf16.msra.mxu0 %v134
    %154 = vmatpush.bf16.msra.mxu0 %v133
    %155 = vmatpush.bf16.msra.mxu0 %v132
    %156 = vmatmul.bf16.gmra.mxu0 %v79
    %v157 = vpop.f32.mrf.mxu0
    %v158 = vadd.f32 %v98, %v157
    %v159 = vpop.f32.mrf.mxu0
    %v160 = vadd.f32 %v98, %v159
    %161 = vdwg.mxu0
    %v162 = vmax.f32 %v158, 0.0
    %v163 = vmax.f32 %v160, 0.0
    %v164 = vpack.c.bf16 %v163, %v162
    %v165 = vld [vmem:[%s5] sm:$0xf]
    %v166 = vld [vmem:[%s5 + $0x4] sm:$0xf]
    %v167 = vld [vmem:[%s5 + $0x8] sm:$0xf]
    %v168 = vld [vmem:[%s5 + $0xc] sm:$0xf]
    %v169 = vld [vmem:[%s5 + $0x10] sm:$0xf]
    %v170 = vld [vmem:[%s5 + $0x14] sm:$0xf]
    %v171 = vld [vmem:[%s5 + $0x18] sm:$0xf]
    %v172 = vld [vmem:[%s5 + $0x1c] sm:$0xf]
    %v173 = vld [vmem:[%s5 + $0x20] sm:$0xf]
    %v174 = vld [vmem:[%s5 + $0x24] sm:$0xf]
    %v175 = vld [vmem:[%s5 + $0x28] sm:$0xf]
    %v176 = vld [vmem:[%s5 + $0x2c] sm:$0xf]
    %v177 = vld [vmem:[%s5 + $0x30] sm:$0xf]
    %v178 = vld [vmem:[%s5 + $0x34] sm:$0xf]
    %v179 = vld [vmem:[%s5 + $0x38] sm:$0xf]
    %v180 = vld [vmem:[%s5 + $0x3c] sm:$0xf]
    %v181 = vld [vmem:[%s6] sm:$0x1]
    %v183 = vperm.slane %v181, 0
    %v201 = vunpack.c.l.b16 %v165
    %v202 = vunpack.c.l.b16 %v166
    %v203 = vunpack.c.l.b16 %v167
    %v204 = vunpack.c.l.b16 %v168
    %v205 = vunpack.c.l.b16 %v169
    %v206 = vunpack.c.l.b16 %v170
    %v207 = vunpack.c.l.b16 %v171
    %v208 = vunpack.c.l.b16 %v172
    %v209 = vunpack.c.l.b16 %v173
    %v210 = vunpack.c.l.b16 %v174
    %v211 = vunpack.c.l.b16 %v175
    %v212 = vunpack.c.l.b16 %v176
    %v213 = vunpack.c.l.b16 %v177
    %v214 = vunpack.c.l.b16 %v178
    %v215 = vunpack.c.l.b16 %v179
    %v216 = vunpack.c.l.b16 %v180
    %v217 = vpack.c.b16 %v202, %v201
    %v218 = vpack.c.b16 %v204, %v203
    %v219 = vpack.c.b16 %v206, %v205
    %v220 = vpack.c.b16 %v208, %v207
    %v221 = vpack.c.b16 %v210, %v209
    %v222 = vpack.c.b16 %v212, %v211
    %v223 = vpack.c.b16 %v214, %v213
    %v224 = vpack.c.b16 %v216, %v215
    %233 = vmatpush.bf16.msra.mxu0 %v224
    %234 = vmatpush.bf16.msra.mxu0 %v223
    %235 = vmatpush.bf16.msra.mxu0 %v222
    %236 = vmatpush.bf16.msra.mxu0 %v221
    %237 = vmatpush.bf16.msra.mxu0 %v220
    %238 = vmatpush.bf16.msra.mxu0 %v219
    %239 = vmatpush.bf16.msra.mxu0 %v218
    %240 = vmatpush.bf16.msra.mxu0 %v217
    %241 = vmatmul.bf16.gmra.mxu0 %v164
    %v242 = vpop.f32.mrf.mxu0
    %v243 = vadd.f32 %v183, %v242
    %v244 = vpop.f32.mrf.mxu0
    %v245 = vadd.f32 %v183, %v244
    %246 = vdwg.mxu0
    %vm247 = vcmask 64512
    %248 = vst.msk [vmem:[#allocation5] sm:$0xff] %vm247, %v243
    %249 = vst.msk [vmem:[#allocation5 + $0x8] sm:$0xff] %vm247, %v245
    // Predicated region
    $region34: #{dqn_forward.1} parent=1 // pred_check
      _
    $region35: #{dqn_forward.1} parent=1 // pred_check_branch
      %251 = sbr.rel (0) target = $region37
    $region36: #{dqn_forward.1} parent=1 // pred_region
      %253 = vsyncadd [#allocation4], 224
      %s254 = sshll.u32 [#allocation5], 4
      %s255 = int_to_ptr.vmem [resolvable:$true] %s254
      %s256 = sshll.u32 %s7, 4
      %s257 = int_to_ptr.hbm [resolvable:$true] %s256
      %262 = dma.vmem_to_hbm [thread:$0]  %s255, 32, %s257, [#allocation4], 32, 32, 2
    $region37: #{dqn_forward.1} parent=1 // pred_fallthru
      _
    // Predicated region
    $region38: #{dqn_forward.1} parent=1 // pred_check
      _
    $region39: #{dqn_forward.1} parent=1 // pred_check_branch
      %264 = sbr.rel (0) target = $region41
    $region40: #{dqn_forward.1} parent=1 // pred_region
      %266 = dma.done [#allocation4], 256
    $region41: #{dqn_forward.1} parent=1 // pred_fallthru
      _
    %267 = vsyncpa [#allocation3], 1
    %268 = vsyncpa [#allocation4], 1

</llo_original>
